<compile_context>
chip_gen: v7x
topology: tpu7x:2x2x1
jax: 0.10.0
libtpu: 0.0.40
codegen_flags: <defaults>
</compile_context>

<pallas_src>
import functools

import jax
import jax.numpy as jnp
from jax.experimental import pallas as pl
from jax.experimental.pallas import tpu as pltpu


def _round_up(x, m):
    return ((x + m - 1) // m) * m


def _cdiv(a, b):
    return -(-a // b)


# ----------------------------------------------------------------------------
# Fused kernel: per-triple scores + softplus margin loss + L2 regularization.
# ----------------------------------------------------------------------------
def _fused_simple_loss_kernel(
        hh_ref, ht_ref, th_ref, tt_ref, r_ref, ri_ref,       # gathered (2,bp,d)
        eh_ref, et_ref,                                       # streamed ent tiles
        rel_ref, rinv_ref,                                    # streamed rel tiles
        out_ref,                                              # (1,8,128) per core
        acc_ent_ref, acc_rel_ref,                             # (8,d) VMEM scratch
        *, batch_size, ent_total, rel_total, regularization, rel_blocks):
    c = pl.program_id(0)            # core / parallel axis
    i = pl.program_id(1)            # streamed accumulation axis
    n_i = pl.num_programs(1)

    @pl.when(i == 0)
    def _init():
        acc_ent_ref[...] = jnp.zeros_like(acc_ent_ref)
        acc_rel_ref[...] = jnp.zeros_like(acc_rel_ref)

    # ---- entity-table L2: lane-resident partial sums (VPU-only per step; the
    #      full cross-lane/cross-sublane reduce happens once at finalize).
    eh = eh_ref[...]
    et = et_ref[...]
    sq = eh * eh + et * et                                    # (ent_block, d)
    acc_ent_ref[...] += jnp.sum(sq.reshape(-1, 8, sq.shape[-1]), axis=0)

    # ---- relation-table L2: streamed on the same grid (core 0, first
    #      rel_blocks steps only; index map is clamped so no extra DMAs occur
    #      after the last relation tile).
    @pl.when((c == 0) & (i < rel_blocks))
    def _rel():
        rl = rel_ref[...]
        rli = rinv_ref[...]
        sqr = rl * rl + rli * rli
        acc_rel_ref[...] += jnp.sum(sqr.reshape(-1, 8, sqr.shape[-1]), axis=0)

    # ---- per-core finalize: each core owns a disjoint slice of the entity
    #      tables and writes its own output block.
    @pl.when(i == n_i - 1)
    def _finalize_partial():
        ent_ss = jnp.sum(acc_ent_ref[...])
        out_ref[...] = (jnp.zeros_like(out_ref)
                        + 0.5 * regularization * ent_ss / ent_total)

    # ---- core 0 additionally computes the triple score loss (deferred to the
    #      tail so it never starves the opening entity-stream DMAs) and the
    #      relation L2 term.
    @pl.when((i == n_i - 1) & (c == 0))
    def _finalize_core0():
        # SimplE score; row 0 = positives, row 1 = negatives.  Reduce each term
        # separately to avoid materializing the full (2, b, d) product.
        s1 = jnp.sum(hh_ref[...] * r_ref[...] * tt_ref[...], axis=-1)   # (2,bp)
        s2 = jnp.sum(ht_ref[...] * ri_ref[...] * th_ref[...], axis=-1)  # (2,bp)
        score = jnp.clip(0.5 * (s1 + s2), -20.0, 20.0)
        diff = score[1:2, :] - score[0:1, :]                            # (1,bp)
        # numerically-stable softplus
        sp = jnp.maximum(diff, 0.0) + jnp.log1p(jnp.exp(-jnp.abs(diff)))
        col = jax.lax.broadcasted_iota(jnp.int32, sp.shape, 1)
        score_loss = jnp.sum(jnp.where(col < batch_size, sp, 0.0))

        rel_ss = jnp.sum(acc_rel_ref[...])
        out_ref[...] += score_loss + 0.5 * regularization * rel_ss / rel_total


def simple_loss(params, triples, config):
    b = int(config["batch_size"])
    n = int(triples.shape[0])
    assert n == 2 * b, "batch_seq_size must equal 2 * batch_size"
    if int(config.get("L", 2)) != 2:
        # TODO(synk): only squared-L2 regularization (config.L == 2) is implemented.
        raise NotImplementedError("only config.L == 2 is supported")

    ent_h, ent_t = params["ent_h"], params["ent_t"]
    rel, rel_inv = params["rel"], params["rel_inv"]
    d = ent_h.shape[1]
    d_pad = _round_up(d, 128)
    b_pad = _round_up(b, 8)

    h_idx = triples[:, 0].astype(jnp.int32)
    r_idx = triples[:, 1].astype(jnp.int32)
    t_idx = triples[:, 2].astype(jnp.int32)

    # --- gather the six embedding streams in the wrapper (dense, lane-aligned).
    def gather(table, idx):
        rows = jnp.take(table, idx, axis=0).reshape(2, b, d)  # (pos/neg, b, d)
        return jnp.pad(rows, ((0, 0), (0, b_pad - b), (0, d_pad - d)))

    hh = gather(ent_h, h_idx)      # ent_h[h]
    ht = gather(ent_h, t_idx)      # ent_h[t]
    th = gather(ent_t, h_idx)      # ent_t[h]
    tt = gather(ent_t, t_idx)      # ent_t[t]
    re_ = gather(rel, r_idx)       # rel[r]
    ri = gather(rel_inv, r_idx)    # rel_inv[r]

    # --- tiling of the streamed tables (zero padding is exact for sum-of-squares).
    NUM_CORES = 2                  # "parallel" axis: 2x on v7x, harmless on v5e/v6e
    ent_rows = ent_h.shape[0]
    ent_block = min(2048, _round_up(ent_rows, 8))
    blocks_total = _cdiv(ent_rows, ent_block)
    blocks_per_core = _cdiv(blocks_total, NUM_CORES)
    ent_rows_pad = NUM_CORES * blocks_per_core * ent_block

    # Relation tables ride the same grid; rel_block is sized so all relation
    # tiles fit within core 0's blocks_per_core steps (fine whenever
    # entTotal >= relTotal, the usual KGE regime).
    rel_rows = rel.shape[0]
    rel_block = _round_up(_cdiv(rel_rows, blocks_per_core), 8)
    rel_blocks = _cdiv(rel_rows, rel_block)
    rel_rows_pad = rel_blocks * rel_block

    def pad_table(x, rows):
        return jnp.pad(x, ((0, rows - x.shape[0]), (0, d_pad - d)))

    eh_p = pad_table(ent_h, ent_rows_pad)
    et_p = pad_table(ent_t, ent_rows_pad)
    rel_p = pad_table(rel, rel_rows_pad)
    rinv_p = pad_table(rel_inv, rel_rows_pad)

    kernel = functools.partial(
        _fused_simple_loss_kernel,
        batch_size=b,
        ent_total=float(config["entTotal"]),
        rel_total=float(config["relTotal"]),
        regularization=float(config["regularization"]),
        rel_blocks=rel_blocks)

    trip_spec = pl.BlockSpec((2, b_pad, d_pad), lambda c, i: (0, 0, 0))  # resident
    ent_spec = pl.BlockSpec((ent_block, d_pad),
                            lambda c, i: (c * blocks_per_core + i, 0))
    rel_spec = pl.BlockSpec((rel_block, d_pad),
                            lambda c, i: (jnp.minimum(i, rel_blocks - 1), 0))

    grid_spec = pltpu.PrefetchScalarGridSpec(
        num_scalar_prefetch=0,
        grid=(NUM_CORES, blocks_per_core),
        in_specs=[trip_spec] * 6 + [ent_spec, ent_spec, rel_spec, rel_spec],
        out_specs=pl.BlockSpec((1, 8, 128), lambda c, i: (c, 0, 0)),
        scratch_shapes=[pltpu.VMEM((8, d_pad), jnp.float32),   # entity-L2 acc
                        pltpu.VMEM((8, d_pad), jnp.float32)],  # relation-L2 acc
    )

    # --- explicit VMEM budget (double-buffered inputs + output + scratch).
    def _nbytes(shape):
        sz = 4
        for s in shape:
            sz *= s
        return sz

    vmem_needed = (6 * 2 * _nbytes((2, b_pad, d_pad))
                   + 2 * 2 * _nbytes((ent_block, d_pad))
                   + 2 * 2 * _nbytes((rel_block, d_pad))
                   + 2 * _nbytes((1, 8, 128))
                   + 2 * _nbytes((8, d_pad)))
    vmem_limit = int(min(max(vmem_needed + (8 << 20), 32 << 20), 64 << 20))

    out = pl.pallas_call(
        kernel,
        out_shape=jax.ShapeDtypeStruct((NUM_CORES, 8, 128), jnp.float32),
        grid_spec=grid_spec,
        compiler_params=pltpu.CompilerParams(
            dimension_semantics=("parallel", "arbitrary"),
            vmem_limit_bytes=vmem_limit),
    )(hh, ht, th, tt, re_, ri, eh_p, et_p, rel_p, rinv_p)

    # Each core wrote its own partial into its block; sum them.
    return jnp.sum(out[:, 0, 0])


# ----------------------------------------------------------------------------
# Pure-JAX reference for correctness checking.
# ----------------------------------------------------------------------------
def reference_loss(params, triples, config):
    h, r, t = triples[:, 0], triples[:, 1], triples[:, 2]
    hh = params["ent_h"][h]
    ht = params["ent_h"][t]
    th = params["ent_t"][h]
    tt = params["ent_t"][t]
    re_ = params["rel"][r]
    ri = params["rel_inv"][r]
    s1 = jnp.sum(hh * re_ * tt, axis=1)
    s2 = jnp.sum(ht * ri * th, axis=1)
    score = jnp.clip((s1 + s2) * 0.5, -20.0, 20.0)
    b = config["batch_size"]
    x = score[b:] - score[:b]
    softplus = jnp.maximum(x, 0.0) + jnp.log1p(jnp.exp(-jnp.abs(x)))
    score_loss = jnp.sum(softplus)
    norm_loss = (jnp.sum(params["ent_h"] ** 2) / config["entTotal"]
                 + jnp.sum(params["ent_t"] ** 2) / config["entTotal"]
                 + jnp.sum(params["rel"] ** 2) / config["relTotal"]
                 + jnp.sum(params["rel_inv"] ** 2) / config["relTotal"]) * 0.5
    return score_loss + norm_loss * config["regularization"]


def xavier_uniform(key, shape):
    fan_out, fan_in = shape
    bound = (6.0 / (fan_in + fan_out)) ** 0.5
    return jax.random.uniform(key, shape, jnp.float32, -bound, bound)


if __name__ == "__main__":
    config = dict(
        entTotal=64,
        relTotal=16,
        hidden_size=128,
        batch_size=8,
        batch_seq_size=16,   # 8 positives followed by 8 negatives
        regularization=0.01,
        L=2,
    )

    key = jax.random.PRNGKey(0)
    k_eh, k_et, k_r, k_ri, k_h, k_rel, k_t = jax.random.split(key, 7)

    params = {
        "ent_h": xavier_uniform(k_eh, (config["entTotal"], config["hidden_size"])),
        "ent_t": xavier_uniform(k_et, (config["entTotal"], config["hidden_size"])),
        "rel": xavier_uniform(k_r, (config["relTotal"], config["hidden_size"])),
        "rel_inv": xavier_uniform(k_ri, (config["relTotal"], config["hidden_size"])),
    }

    n = config["batch_seq_size"]
    h_col = jax.random.randint(k_h, (n, 1), 0, config["entTotal"], jnp.int32)
    r_col = jax.random.randint(k_rel, (n, 1), 0, config["relTotal"], jnp.int32)
    t_col = jax.random.randint(k_t, (n, 1), 0, config["entTotal"], jnp.int32)
    triples = jnp.concatenate([h_col, r_col, t_col], axis=1)  # (batch_seq, 3)

    loss = simple_loss(params, triples, config)
    loss = jax.block_until_ready(loss)

    ref = jax.block_until_ready(reference_loss(params, triples, config))
    assert jnp.allclose(loss, ref, rtol=1e-5, atol=1e-5), (loss, ref)

    print("KERNEL_OK")
</pallas_src>

<mosaic_0001>
module attributes {stable_mosaic.version = 11 : i64} {
  func.func @_fused_simple_loss_kernel(%arg0: i32, %arg1: i32, %arg2: memref<2x8x128xf32, #tpu.memory_space<vmem>>, %arg3: memref<2x8x128xf32, #tpu.memory_space<vmem>>, %arg4: memref<2x8x128xf32, #tpu.memory_space<vmem>>, %arg5: memref<2x8x128xf32, #tpu.memory_space<vmem>>, %arg6: memref<2x8x128xf32, #tpu.memory_space<vmem>>, %arg7: memref<2x8x128xf32, #tpu.memory_space<vmem>>, %arg8: memref<64x128xf32, #tpu.memory_space<vmem>>, %arg9: memref<64x128xf32, #tpu.memory_space<vmem>>, %arg10: memref<16x128xf32, #tpu.memory_space<vmem>>, %arg11: memref<16x128xf32, #tpu.memory_space<vmem>>, %arg12: memref<1x8x128xf32, #tpu.memory_space<vmem>>, %arg13: memref<8x128xf32, #tpu.memory_space<vmem>>, %arg14: memref<8x128xf32, #tpu.memory_space<vmem>>) attributes {dimension_semantics = [#tpu.dimension_semantics<parallel>, #tpu.dimension_semantics<arbitrary>], iteration_bounds = array<i64: 2, 1>, scalar_prefetch = 0 : i64, scratch_operands = 2 : i64, tpu.core_type = #tpu.core_type<tc>, window_params = [{pipeline_mode = #tpu.pipeline_mode<synchronous>, transform_indices = @transform_0, window_bounds = array<i64: 2, 8, 128>}, {pipeline_mode = #tpu.pipeline_mode<synchronous>, transform_indices = @transform_1, window_bounds = array<i64: 2, 8, 128>}, {pipeline_mode = #tpu.pipeline_mode<synchronous>, transform_indices = @transform_2, window_bounds = array<i64: 2, 8, 128>}, {pipeline_mode = #tpu.pipeline_mode<synchronous>, transform_indices = @transform_3, window_bounds = array<i64: 2, 8, 128>}, {pipeline_mode = #tpu.pipeline_mode<synchronous>, transform_indices = @transform_4, window_bounds = array<i64: 2, 8, 128>}, {pipeline_mode = #tpu.pipeline_mode<synchronous>, transform_indices = @transform_5, window_bounds = array<i64: 2, 8, 128>}, {transform_indices = @transform_6, window_bounds = array<i64: 64, 128>}, {transform_indices = @transform_7, window_bounds = array<i64: 64, 128>}, {transform_indices = @transform_8, window_bounds = array<i64: 16, 128>}, {transform_indices = @transform_9, window_bounds = array<i64: 16, 128>}, {transform_indices = @transform_10, window_bounds = array<i64: 1, 8, 128>}]} {
    %c0_i32 = arith.constant 0 : i32
    %0 = arith.cmpi eq, %arg1, %c0_i32 : i32
    %1 = arith.extui %0 : i1 to i32
    %c0_i32_0 = arith.constant 0 : i32
    %2 = arith.cmpi ne, %1, %c0_i32_0 : i32
    scf.if %2 {
      %cst_15 = arith.constant 0.000000e+00 : f32
      %26 = vector.broadcast %cst_15 : f32 to vector<8x128xf32>
      %c0_16 = arith.constant 0 : index
      %c0_17 = arith.constant 0 : index
      %27 = vector.load %arg13[%c0_16, %c0_17] : memref<8x128xf32, #tpu.memory_space<vmem>>, vector<8x128xf32>
      tpu.vector_store %arg13[%c0_16, %c0_17], %26 {strides = array<i32>} : memref<8x128xf32, #tpu.memory_space<vmem>>, vector<8x128xf32>,
      %cst_18 = arith.constant 0.000000e+00 : f32
      %28 = vector.broadcast %cst_18 : f32 to vector<8x128xf32>
      %c0_19 = arith.constant 0 : index
      %c0_20 = arith.constant 0 : index
      %29 = vector.load %arg14[%c0_19, %c0_20] : memref<8x128xf32, #tpu.memory_space<vmem>>, vector<8x128xf32>
      tpu.vector_store %arg14[%c0_19, %c0_20], %28 {strides = array<i32>} : memref<8x128xf32, #tpu.memory_space<vmem>>, vector<8x128xf32>,
    } else {
    }
    %c0 = arith.constant 0 : index
    %c0_1 = arith.constant 0 : index
    %3 = vector.load %arg8[%c0, %c0_1] : memref<64x128xf32, #tpu.memory_space<vmem>>, vector<64x128xf32>
    %c0_2 = arith.constant 0 : index
    %c0_3 = arith.constant 0 : index
    %4 = vector.load %arg9[%c0_2, %c0_3] : memref<64x128xf32, #tpu.memory_space<vmem>>, vector<64x128xf32>
    %5 = arith.mulf %3, %3 : vector<64x128xf32>
    %6 = arith.mulf %4, %4 : vector<64x128xf32>
    %7 = arith.addf %5, %6 : vector<64x128xf32>
    %c0_4 = arith.constant 0 : index
    %c0_5 = arith.constant 0 : index
    %8 = vector.load %arg13[%c0_4, %c0_5] : memref<8x128xf32, #tpu.memory_space<vmem>>, vector<8x128xf32>
    %9 = vector.shape_cast %7 : vector<64x128xf32> to vector<8x8x128xf32>
    %cst = arith.constant dense<0.000000e+00> : vector<8x128xf32>
    %10 = vector.multi_reduction <add>, %9, %cst [0] : vector<8x8x128xf32> to vector<8x128xf32>
    %11 = arith.addf %8, %10 : vector<8x128xf32>
    %c0_6 = arith.constant 0 : index
    %c0_7 = arith.constant 0 : index
    %12 = vector.load %arg13[%c0_6, %c0_7] : memref<8x128xf32, #tpu.memory_space<vmem>>, vector<8x128xf32>
    tpu.vector_store %arg13[%c0_6, %c0_7], %11 {strides = array<i32>} : memref<8x128xf32, #tpu.memory_space<vmem>>, vector<8x128xf32>,
    %c0_i32_8 = arith.constant 0 : i32
    %13 = arith.cmpi eq, %arg0, %c0_i32_8 : i32
    %c1_i32 = arith.constant 1 : i32
    %14 = arith.cmpi slt, %arg1, %c1_i32 : i32
    %15 = arith.andi %13, %14 : i1
    %16 = arith.extui %15 : i1 to i32
    %c0_i32_9 = arith.constant 0 : i32
    %17 = arith.cmpi ne, %16, %c0_i32_9 : i32
    scf.if %17 {
      %c0_15 = arith.constant 0 : index
      %c0_16 = arith.constant 0 : index
      %26 = vector.load %arg10[%c0_15, %c0_16] : memref<16x128xf32, #tpu.memory_space<vmem>>, vector<16x128xf32>
      %c0_17 = arith.constant 0 : index
      %c0_18 = arith.constant 0 : index
      %27 = vector.load %arg11[%c0_17, %c0_18] : memref<16x128xf32, #tpu.memory_space<vmem>>, vector<16x128xf32>
      %28 = arith.mulf %26, %26 : vector<16x128xf32>
      %29 = arith.mulf %27, %27 : vector<16x128xf32>
      %30 = arith.addf %28, %29 : vector<16x128xf32>
      %c0_19 = arith.constant 0 : index
      %c0_20 = arith.constant 0 : index
      %31 = vector.load %arg14[%c0_19, %c0_20] : memref<8x128xf32, #tpu.memory_space<vmem>>, vector<8x128xf32>
      %32 = vector.shape_cast %30 : vector<16x128xf32> to vector<2x8x128xf32>
      %cst_21 = arith.constant dense<0.000000e+00> : vector<8x128xf32>
      %33 = vector.multi_reduction <add>, %32, %cst_21 [0] : vector<2x8x128xf32> to vector<8x128xf32>
      %34 = arith.addf %31, %33 : vector<8x128xf32>
      %c0_22 = arith.constant 0 : index
      %c0_23 = arith.constant 0 : index
      %35 = vector.load %arg14[%c0_22, %c0_23] : memref<8x128xf32, #tpu.memory_space<vmem>>, vector<8x128xf32>
      tpu.vector_store %arg14[%c0_22, %c0_23], %34 {strides = array<i32>} : memref<8x128xf32, #tpu.memory_space<vmem>>, vector<8x128xf32>,
    } else {
    }
    %c0_i32_10 = arith.constant 0 : i32
    %18 = arith.cmpi eq, %arg1, %c0_i32_10 : i32
    %19 = arith.extui %18 : i1 to i32
    %c0_i32_11 = arith.constant 0 : i32
    %20 = arith.cmpi ne, %19, %c0_i32_11 : i32
    scf.if %20 {
      %c0_15 = arith.constant 0 : index
      %c0_16 = arith.constant 0 : index
      %26 = vector.load %arg13[%c0_15, %c0_16] : memref<8x128xf32, #tpu.memory_space<vmem>>, vector<8x128xf32>
      %27 = vector.shape_cast %26 : vector<8x128xf32> to vector<1x8x128xf32>
      %cst_17 = arith.constant dense<0.000000e+00> : vector<1xf32>
      %28 = vector.multi_reduction <add>, %27, %cst_17 [1, 2] : vector<1x8x128xf32> to vector<1xf32>
      %29 = vector.shape_cast %28 : vector<1xf32> to vector<1x1x1xf32>
      %30 = vector.extract %29[0, 0, 0] : f32 from vector<1x1x1xf32>
      %cst_18 = arith.constant 0.000000e+00 : f32
      %31 = vector.broadcast %cst_18 : f32 to vector<1x8x128xf32>
      %cst_19 = arith.constant 5.000000e-03 : f32
      %32 = arith.mulf %cst_19, %30 : f32
      %cst_20 = arith.constant 6.400000e+01 : f32
      %33 = arith.divf %32, %cst_20 : f32
      %34 = vector.broadcast %33 : f32 to vector<1x8x128xf32>
      %35 = arith.addf %31, %34 : vector<1x8x128xf32>
      %c0_21 = arith.constant 0 : index
      %c0_22 = arith.constant 0 : index
      %c0_23 = arith.constant 0 : index
      %36 = vector.load %arg12[%c0_21, %c0_22, %c0_23] : memref<1x8x128xf32, #tpu.memory_space<vmem>>, vector<1x8x128xf32>
      tpu.vector_store %arg12[%c0_21, %c0_22, %c0_23], %35 {strides = array<i32>} : memref<1x8x128xf32, #tpu.memory_space<vmem>>, vector<1x8x128xf32>,
    } else {
    }
    %c0_i32_12 = arith.constant 0 : i32
    %21 = arith.cmpi eq, %arg1, %c0_i32_12 : i32
    %c0_i32_13 = arith.constant 0 : i32
    %22 = arith.cmpi eq, %arg0, %c0_i32_13 : i32
    %23 = arith.andi %21, %22 : i1
    %24 = arith.extui %23 : i1 to i32
    %c0_i32_14 = arith.constant 0 : i32
    %25 = arith.cmpi ne, %24, %c0_i32_14 : i32
    scf.if %25 {
      %c0_15 = arith.constant 0 : index
      %c0_16 = arith.constant 0 : index
      %c0_17 = arith.constant 0 : index
      %26 = vector.load %arg2[%c0_15, %c0_16, %c0_17] : memref<2x8x128xf32, #tpu.memory_space<vmem>>, vector<2x8x128xf32>
      %c0_18 = arith.constant 0 : index
      %c0_19 = arith.constant 0 : index
      %c0_20 = arith.constant 0 : index
      %27 = vector.load %arg6[%c0_18, %c0_19, %c0_20] : memref<2x8x128xf32, #tpu.memory_space<vmem>>, vector<2x8x128xf32>
      %28 = arith.mulf %26, %27 : vector<2x8x128xf32>
      %c0_21 = arith.constant 0 : index
      %c0_22 = arith.constant 0 : index
      %c0_23 = arith.constant 0 : index
      %29 = vector.load %arg5[%c0_21, %c0_22, %c0_23] : memref<2x8x128xf32, #tpu.memory_space<vmem>>, vector<2x8x128xf32>
      %30 = arith.mulf %28, %29 : vector<2x8x128xf32>
      %cst_24 = arith.constant dense<0.000000e+00> : vector<2x8xf32>
      %31 = vector.multi_reduction <add>, %30, %cst_24 [2] : vector<2x8x128xf32> to vector<2x8xf32>
      %c0_25 = arith.constant 0 : index
      %c0_26 = arith.constant 0 : index
      %c0_27 = arith.constant 0 : index
      %32 = vector.load %arg3[%c0_25, %c0_26, %c0_27] : memref<2x8x128xf32, #tpu.memory_space<vmem>>, vector<2x8x128xf32>
      %c0_28 = arith.constant 0 : index
      %c0_29 = arith.constant 0 : index
      %c0_30 = arith.constant 0 : index
      %33 = vector.load %arg7[%c0_28, %c0_29, %c0_30] : memref<2x8x128xf32, #tpu.memory_space<vmem>>, vector<2x8x128xf32>
      %34 = arith.mulf %32, %33 : vector<2x8x128xf32>
      %c0_31 = arith.constant 0 : index
      %c0_32 = arith.constant 0 : index
      %c0_33 = arith.constant 0 : index
      %35 = vector.load %arg4[%c0_31, %c0_32, %c0_33] : memref<2x8x128xf32, #tpu.memory_space<vmem>>, vector<2x8x128xf32>
      %36 = arith.mulf %34, %35 : vector<2x8x128xf32>
      %cst_34 = arith.constant dense<0.000000e+00> : vector<2x8xf32>
      %37 = vector.multi_reduction <add>, %36, %cst_34 [2] : vector<2x8x128xf32> to vector<2x8xf32>
      %38 = arith.addf %31, %37 : vector<2x8xf32>
      %cst_35 = arith.constant 5.000000e-01 : f32
      %39 = vector.broadcast %cst_35 : f32 to vector<2x8xf32>
      %40 = arith.mulf %39, %38 : vector<2x8xf32>
      %cst_36 = arith.constant -2.000000e+01 : f32
      %cst_37 = arith.constant 2.000000e+01 : f32
      %41 = vector.broadcast %cst_36 : f32 to vector<2x8xf32>
      %42 = arith.maximumf %41, %40 : vector<2x8xf32>
      %43 = vector.broadcast %cst_37 : f32 to vector<2x8xf32>
      %44 = arith.minimumf %43, %42 : vector<2x8xf32>
      %45 = vector.extract_strided_slice %44 {offsets = [1, 0], sizes = [1, 8], strides = [1, 1]} : vector<2x8xf32> to vector<1x8xf32>
      %46 = vector.extract_strided_slice %44 {offsets = [0, 0], sizes = [1, 8], strides = [1, 1]} : vector<2x8xf32> to vector<1x8xf32>
      %47 = arith.subf %45, %46 : vector<1x8xf32>
      %cst_38 = arith.constant 0.000000e+00 : f32
      %48 = vector.broadcast %cst_38 : f32 to vector<1x8xf32>
      %49 = arith.maximumf %47, %48 : vector<1x8xf32>
      %50 = math.absf %47 : vector<1x8xf32>
      %cst_39 = arith.constant 0.000000e+00 : f32
      %51 = vector.broadcast %cst_39 : f32 to vector<1x8xf32>
      %52 = arith.subf %51, %50 : vector<1x8xf32>
      %53 = math.exp %52 : vector<1x8xf32>
      %54 = math.log1p %53 : vector<1x8xf32>
      %55 = arith.addf %49, %54 : vector<1x8xf32>
      %56 = tpu.iota {dimensions = array<i32: 1>} : vector<1x8xi32>
      %c8_i32 = arith.constant 8 : i32
      %57 = vector.broadcast %c8_i32 : i32 to vector<1x8xi32>
      %58 = arith.cmpi slt, %56, %57 : vector<1x8xi32>
      %cst_40 = arith.constant 0.000000e+00 : f32
      %59 = vector.broadcast %cst_40 : f32 to vector<1x8xf32>
      %60 = arith.select %58, %55, %59 : vector<1x8xi1>, vector<1x8xf32>
      %61 = vector.shape_cast %60 : vector<1x8xf32> to vector<1x1x8xf32>
      %cst_41 = arith.constant dense<0.000000e+00> : vector<1xf32>
      %62 = vector.multi_reduction <add>, %61, %cst_41 [1, 2] : vector<1x1x8xf32> to vector<1xf32>
      %63 = vector.shape_cast %62 : vector<1xf32> to vector<1x1x1xf32>
      %64 = vector.extract %63[0, 0, 0] : f32 from vector<1x1x1xf32>
      %c0_42 = arith.constant 0 : index
      %c0_43 = arith.constant 0 : index
      %65 = vector.load %arg14[%c0_42, %c0_43] : memref<8x128xf32, #tpu.memory_space<vmem>>, vector<8x128xf32>
      %66 = vector.shape_cast %65 : vector<8x128xf32> to vector<1x8x128xf32>
      %cst_44 = arith.constant dense<0.000000e+00> : vector<1xf32>
      %67 = vector.multi_reduction <add>, %66, %cst_44 [1, 2] : vector<1x8x128xf32> to vector<1xf32>
      %68 = vector.shape_cast %67 : vector<1xf32> to vector<1x1x1xf32>
      %69 = vector.extract %68[0, 0, 0] : f32 from vector<1x1x1xf32>
      %c0_45 = arith.constant 0 : index
      %c0_46 = arith.constant 0 : index
      %c0_47 = arith.constant 0 : index
      %70 = vector.load %arg12[%c0_45, %c0_46, %c0_47] : memref<1x8x128xf32, #tpu.memory_space<vmem>>, vector<1x8x128xf32>
      %cst_48 = arith.constant 5.000000e-03 : f32
      %71 = arith.mulf %cst_48, %69 : f32
      %cst_49 = arith.constant 1.600000e+01 : f32
      %72 = arith.divf %71, %cst_49 : f32
      %73 = arith.addf %64, %72 : f32
      %74 = vector.broadcast %73 : f32 to vector<1x8x128xf32>
      %75 = arith.addf %70, %74 : vector<1x8x128xf32>
      %c0_50 = arith.constant 0 : index
      %c0_51 = arith.constant 0 : index
      %c0_52 = arith.constant 0 : index
      %76 = vector.load %arg12[%c0_50, %c0_51, %c0_52] : memref<1x8x128xf32, #tpu.memory_space<vmem>>, vector<1x8x128xf32>
      tpu.vector_store %arg12[%c0_50, %c0_51, %c0_52], %75 {strides = array<i32>} : memref<1x8x128xf32, #tpu.memory_space<vmem>>, vector<1x8x128xf32>,
    } else {
    }
    return
  }
  func.func @transform_0(%arg0: i32, %arg1: i32) -> (i32, i32, i32) {
    %c0_i32 = arith.constant 0 : i32
    %c0_i32_0 = arith.constant 0 : i32
    %c0_i32_1 = arith.constant 0 : i32
    %c0_i32_2 = arith.constant 0 : i32
    return %c0_i32, %c0_i32_0, %c0_i32_1 : i32, i32, i32
  }
  func.func @transform_1(%arg0: i32, %arg1: i32) -> (i32, i32, i32) {
    %c0_i32 = arith.constant 0 : i32
    %c0_i32_0 = arith.constant 0 : i32
    %c0_i32_1 = arith.constant 0 : i32
    %c0_i32_2 = arith.constant 0 : i32
    return %c0_i32, %c0_i32_0, %c0_i32_1 : i32, i32, i32
  }
  func.func @transform_2(%arg0: i32, %arg1: i32) -> (i32, i32, i32) {
    %c0_i32 = arith.constant 0 : i32
    %c0_i32_0 = arith.constant 0 : i32
    %c0_i32_1 = arith.constant 0 : i32
    %c0_i32_2 = arith.constant 0 : i32
    return %c0_i32, %c0_i32_0, %c0_i32_1 : i32, i32, i32
  }
  func.func @transform_3(%arg0: i32, %arg1: i32) -> (i32, i32, i32) {
    %c0_i32 = arith.constant 0 : i32
    %c0_i32_0 = arith.constant 0 : i32
    %c0_i32_1 = arith.constant 0 : i32
    %c0_i32_2 = arith.constant 0 : i32
    return %c0_i32, %c0_i32_0, %c0_i32_1 : i32, i32, i32
  }
  func.func @transform_4(%arg0: i32, %arg1: i32) -> (i32, i32, i32) {
    %c0_i32 = arith.constant 0 : i32
    %c0_i32_0 = arith.constant 0 : i32
    %c0_i32_1 = arith.constant 0 : i32
    %c0_i32_2 = arith.constant 0 : i32
    return %c0_i32, %c0_i32_0, %c0_i32_1 : i32, i32, i32
  }
  func.func @transform_5(%arg0: i32, %arg1: i32) -> (i32, i32, i32) {
    %c0_i32 = arith.constant 0 : i32
    %c0_i32_0 = arith.constant 0 : i32
    %c0_i32_1 = arith.constant 0 : i32
    %c0_i32_2 = arith.constant 0 : i32
    return %c0_i32, %c0_i32_0, %c0_i32_1 : i32, i32, i32
  }
  func.func @transform_6(%arg0: i32, %arg1: i32) -> (i32, i32) {
    %c1_i32 = arith.constant 1 : i32
    %0 = arith.muli %arg0, %c1_i32 : i32
    %1 = arith.addi %0, %arg1 : i32
    %c0_i32 = arith.constant 0 : i32
    %c0_i32_0 = arith.constant 0 : i32
    return %1, %c0_i32 : i32, i32
  }
  func.func @transform_7(%arg0: i32, %arg1: i32) -> (i32, i32) {
    %c1_i32 = arith.constant 1 : i32
    %0 = arith.muli %arg0, %c1_i32 : i32
    %1 = arith.addi %0, %arg1 : i32
    %c0_i32 = arith.constant 0 : i32
    %c0_i32_0 = arith.constant 0 : i32
    return %1, %c0_i32 : i32, i32
  }
  func.func @transform_8(%arg0: i32, %arg1: i32) -> (i32, i32) {
    %c0_i32 = arith.constant 0 : i32
    %0 = arith.minsi %arg1, %c0_i32 : i32
    %c0_i32_0 = arith.constant 0 : i32
    %c0_i32_1 = arith.constant 0 : i32
    return %0, %c0_i32_0 : i32, i32
  }
  func.func @transform_9(%arg0: i32, %arg1: i32) -> (i32, i32) {
    %c0_i32 = arith.constant 0 : i32
    %0 = arith.minsi %arg1, %c0_i32 : i32
    %c0_i32_0 = arith.constant 0 : i32
    %c0_i32_1 = arith.constant 0 : i32
    return %0, %c0_i32_0 : i32, i32
  }
  func.func @transform_10(%arg0: i32, %arg1: i32) -> (i32, i32, i32) {
    %c0_i32 = arith.constant 0 : i32
    %c0_i32_0 = arith.constant 0 : i32
    %c0_i32_1 = arith.constant 0 : i32
    return %arg0, %c0_i32, %c0_i32_0 : i32, i32, i32
  }
}

</mosaic_0001>

<llo_original>
// kernel: tpu_custom_call.1
$region0: #{tpu_custom_call.1}
  #allocation0 [shape = 'u32[]', space=smem, size = 0x4, offset = 0x4, fixed_abs, tag = 'smem constant byte address 0x4 - core index']
  #allocation1 [shape = 'u32[144,128]{1,0:T(1,128)}', space=vmem, size = 0x12000, scoped, tag = 'internal scratch']
  #allocation2 [shape = 'f32[8,128]{1,0:T(8,128)}', space=vmem, size = 0x1000, scoped, tag = 'scratch operand']
  #allocation3 [shape = 'f32[8,128]{1,0:T(8,128)}', space=vmem, size = 0x1000, scoped, tag = 'scratch operand']
  %s0 = inlined_call_operand.hbm [shape: f32[2,8,128], index: 0, kind: input, shape index: {}]
  %s1 = inlined_call_operand.hbm [shape: f32[2,8,128], index: 1, kind: input, shape index: {}]
  %s2 = inlined_call_operand.hbm [shape: f32[2,8,128], index: 2, kind: input, shape index: {}]
  %s3 = inlined_call_operand.hbm [shape: f32[2,8,128], index: 3, kind: input, shape index: {}]
  %s4 = inlined_call_operand.hbm [shape: f32[2,8,128], index: 4, kind: input, shape index: {}]
  %s5 = inlined_call_operand.vmem [shape: f32[2,8,128], index: 5, kind: input, shape index: {}]
  %s6 = inlined_call_operand.hbm [shape: f32[128,128], index: 6, kind: input, shape index: {}]
  %s7 = inlined_call_operand.hbm [shape: f32[128,128], index: 7, kind: input, shape index: {}]
  %s8 = inlined_call_operand.hbm [shape: f32[16,128], index: 8, kind: input, shape index: {}]
  %s9 = inlined_call_operand.vmem [shape: f32[16,128], index: 9, kind: input, shape index: {}]
  %s10 = inlined_call_operand.hbm [shape: f32[2,8,128], index: 10, kind: output, shape index: {}]
  %s11 = sld [smem:[#allocation0]]
  $region121: #{tpu_custom_call.1} parent=0
    _
  %s13 = ssub.s32 1, %s11
  %s14 = scalar_select 0, %s13, %s11
  $region1: #{tpu_custom_call.1} parent=0
    #allocation4 [shape = 'u8[8192]{0}', space=vmem, size = 0x2000, scoped, tag = 'input window, operand 0, single buffered']
    #allocation5 [shape = 's32[2]{0}', space=sflag, size = 0x8, scoped, tag = 'scoped memory for tpu_custom_call.1']
    #allocation6 [shape = 's32[2]{0}', space=sflag, size = 0x8, scoped, tag = 'scoped memory for tpu_custom_call.1']
    #allocation7 [shape = 'u8[8192]{0}', space=vmem, size = 0x2000, scoped, tag = 'input window, operand 1, single buffered']
    #allocation8 [shape = 's32[1]{0}', space=sflag, size = 0x4, scoped, tag = 'scoped memory for tpu_custom_call.1']
    #allocation9 [shape = 'u8[8192]{0}', space=vmem, size = 0x2000, scoped, tag = 'input window, operand 2, single buffered']
    #allocation10 [shape = 'u8[8192]{0}', space=vmem, size = 0x2000, scoped, tag = 'input window, operand 3, single buffered']
    #allocation11 [shape = 's32[1]{0}', space=sflag, size = 0x4, scoped, tag = 'scoped memory for tpu_custom_call.1']
    #allocation12 [shape = 'u8[8192]{0}', space=vmem, size = 0x2000, scoped, tag = 'input window, operand 4, single buffered']
    #allocation13 [shape = 'u8[65536]{0}', space=vmem, size = 0x10000, scoped, tag = 'input window, operand 6']
    #allocation14 [shape = 's32[2]{0}', space=sflag, size = 0x8, scoped, tag = 'scoped memory for tpu_custom_call.1']
    #allocation15 [shape = 'u8[65536]{0}', space=vmem, size = 0x10000, scoped, tag = 'input window, operand 7']
    #allocation16 [shape = 'u8[8192]{0}', space=vmem, size = 0x2000, scoped, tag = 'input window, operand 8, single buffered']
    #allocation17 [shape = 's32[1]{0}', space=sflag, size = 0x4, scoped, tag = 'scoped memory for tpu_custom_call.1']
    #allocation18 [shape = 'u8[8192]{0}', space=vmem, size = 0x2000, scoped, tag = 'output window, operand 0']
    %15 = vsyncpa [#allocation5], 0
    %16 = vsyncpa [#allocation8], 0
    %17 = vsyncpa [#allocation11], 0
    %18 = vsyncpa [#allocation14], 0
    %s19 = scalar_lea.sflag [#allocation14], 1
    %20 = vsyncpa %s19, 0
    %21 = vsyncpa [#allocation17], 0
    %22 = vsyncpa [#allocation6], 0
    %s23 = scalar_lea.sflag [#allocation6], 1
    %24 = vsyncpa %s23, 0
    loop: start=0, step=1, limit=4
    $region2: #{tpu_custom_call.1} parent=1 // loop_pre_header
      _
    $region3: #{tpu_custom_call.1} parent=1 // loop_header
      %s26 = sphi 0, %s30
      %p27 = scmp.ge.s32.totalorder %s26, 4
      %s33 = sphi 0, %s45
      %s34 = sphi 0, %s41
      %s35 = sphi 0, %s33
      %s36 = sphi 0, %s34
      %s37 = sphi 0, %s35
      %s38 = sphi 0, %s36
      %s46 = sphi 0, %s46
      %s48 = sphi 0, %s46
      %s49 = sphi 0, %s48
      %s63 = sphi 0, %s49
      %s67 = sphi 0, %s67
      %s69 = sphi 0, %s67
      %s70 = sphi 0, %s69
      %s84 = sphi 0, %s70
      %s88 = sphi 0, %s88
      %s90 = sphi 0, %s88
      %s91 = sphi 0, %s90
      %s105 = sphi 0, %s91
      %s109 = sphi 0, %s109
      %s111 = sphi 0, %s109
      %s112 = sphi 0, %s111
      %s126 = sphi 0, %s112
      %s130 = sphi 0, %s130
      %s132 = sphi 0, %s130
      %s133 = sphi 0, %s132
      %s147 = sphi 0, %s133
      %s151 = sphi 0, %s151
      %s153 = sphi 0, %s151
      %s154 = sphi 0, %s153
      %s168 = sphi 0, %s154
      %s176 = sphi 0, %s178
      %s179 = sphi 0, %s176
      %s180 = sphi 0, %s179
      %s196 = sphi 0, %s180
      %s204 = sphi 0, %s206
      %s207 = sphi 0, %s204
      %s208 = sphi 0, %s207
      %s224 = sphi 0, %s208
      %s234 = sphi 0, %s236
      %s237 = sphi 0, %s234
      %s238 = sphi 0, %s237
      %s254 = sphi 0, %s238
      %s264 = sphi 0, %s266
      %s267 = sphi 0, %s264
      %s268 = sphi 0, %s267
      %s284 = sphi 0, %s268
      %s290 = sphi 0, %s292
      %s293 = sphi 0, %s290
      %s294 = sphi 0, %s293
      %s310 = sphi 0, %s294
    $region4: #{tpu_custom_call.1} parent=1 // loop_header_branch
      %29 = sbr.rel (%p27) target = $region8
    $region5: #{tpu_custom_call.1} parent=1 // loop_body
      %s31 = ssub.s32 %s26, 1
      %s32 = ssub.s32 %s26, 2
      %s39 = sadd.s32 1, %s34
      %p40 = scmp.ge.s32.totalorder %s39, 1
      %s41 = scalar_select %p40, 0, %s39
      %s42 = sadd.s32 1, %s33
      %s43 = scalar_select %p40, %s42, %s33
      %p44 = scmp.ge.s32.totalorder %s43, 2
      %s45 = scalar_select %p44, 0, %s43
      %s47 = sadd.s32 %s46, 1
      %p50 = scmp.eq.s32.totalorder %s26, 1
      %p51 = scmp.ne.s32.totalorder %s46, %s48
      %p52 = scmp.eq.s32.totalorder %s26, 0
      %p53 = por %p51, %p52
      %p54 = scmp.ne.s32.totalorder %s46, %s48
      %p55 = scmp.eq.s32.totalorder %s31, 1
      %p56 = por %p54, %p55
      %p57 = scmp.ne.s32.totalorder %s48, %s49
      %p58 = scmp.eq.s32.totalorder %s31, 0
      %p59 = por %p57, %p58
      %p60 = scmp.ne.s32.totalorder %s48, %s49
      %p61 = scmp.eq.s32.totalorder %s32, 1
      %p62 = por %p60, %p61
      %p64 = scmp.ne.s32.totalorder %s49, %s63
      %p65 = scmp.eq.s32.totalorder %s32, 0
      %p66 = por %p64, %p65
      %s68 = sadd.s32 %s67, 1
      %p71 = scmp.eq.s32.totalorder %s26, 1
      %p72 = scmp.ne.s32.totalorder %s67, %s69
      %p73 = scmp.eq.s32.totalorder %s26, 0
      %p74 = por %p72, %p73
      %p75 = scmp.ne.s32.totalorder %s67, %s69
      %p76 = scmp.eq.s32.totalorder %s31, 1
      %p77 = por %p75, %p76
      %p78 = scmp.ne.s32.totalorder %s69, %s70
      %p79 = scmp.eq.s32.totalorder %s31, 0
      %p80 = por %p78, %p79
      %p81 = scmp.ne.s32.totalorder %s69, %s70
      %p82 = scmp.eq.s32.totalorder %s32, 1
      %p83 = por %p81, %p82
      %p85 = scmp.ne.s32.totalorder %s70, %s84
      %p86 = scmp.eq.s32.totalorder %s32, 0
      %p87 = por %p85, %p86
      %s89 = sadd.s32 %s88, 1
      %p92 = scmp.eq.s32.totalorder %s26, 1
      %p93 = scmp.ne.s32.totalorder %s88, %s90
      %p94 = scmp.eq.s32.totalorder %s26, 0
      %p95 = por %p93, %p94
      %p96 = scmp.ne.s32.totalorder %s88, %s90
      %p97 = scmp.eq.s32.totalorder %s31, 1
      %p98 = por %p96, %p97
      %p99 = scmp.ne.s32.totalorder %s90, %s91
      %p100 = scmp.eq.s32.totalorder %s31, 0
      %p101 = por %p99, %p100
      %p102 = scmp.ne.s32.totalorder %s90, %s91
      %p103 = scmp.eq.s32.totalorder %s32, 1
      %p104 = por %p102, %p103
      %p106 = scmp.ne.s32.totalorder %s91, %s105
      %p107 = scmp.eq.s32.totalorder %s32, 0
      %p108 = por %p106, %p107
      %s110 = sadd.s32 %s109, 1
      %p113 = scmp.eq.s32.totalorder %s26, 1
      %p114 = scmp.ne.s32.totalorder %s109, %s111
      %p115 = scmp.eq.s32.totalorder %s26, 0
      %p116 = por %p114, %p115
      %p117 = scmp.ne.s32.totalorder %s109, %s111
      %p118 = scmp.eq.s32.totalorder %s31, 1
      %p119 = por %p117, %p118
      %p120 = scmp.ne.s32.totalorder %s111, %s112
      %p121 = scmp.eq.s32.totalorder %s31, 0
      %p122 = por %p120, %p121
      %p123 = scmp.ne.s32.totalorder %s111, %s112
      %p124 = scmp.eq.s32.totalorder %s32, 1
      %p125 = por %p123, %p124
      %p127 = scmp.ne.s32.totalorder %s112, %s126
      %p128 = scmp.eq.s32.totalorder %s32, 0
      %p129 = por %p127, %p128
      %s131 = sadd.s32 %s130, 1
      %p134 = scmp.eq.s32.totalorder %s26, 1
      %p135 = scmp.ne.s32.totalorder %s130, %s132
      %p136 = scmp.eq.s32.totalorder %s26, 0
      %p137 = por %p135, %p136
      %p138 = scmp.ne.s32.totalorder %s130, %s132
      %p139 = scmp.eq.s32.totalorder %s31, 1
      %p140 = por %p138, %p139
      %p141 = scmp.ne.s32.totalorder %s132, %s133
      %p142 = scmp.eq.s32.totalorder %s31, 0
      %p143 = por %p141, %p142
      %p144 = scmp.ne.s32.totalorder %s132, %s133
      %p145 = scmp.eq.s32.totalorder %s32, 1
      %p146 = por %p144, %p145
      %p148 = scmp.ne.s32.totalorder %s133, %s147
      %p149 = scmp.eq.s32.totalorder %s32, 0
      %p150 = por %p148, %p149
      %s152 = sadd.s32 %s151, 1
      %p155 = scmp.eq.s32.totalorder %s26, 1
      %p156 = scmp.ne.s32.totalorder %s151, %s153
      %p157 = scmp.eq.s32.totalorder %s26, 0
      %p158 = por %p156, %p157
      %p159 = scmp.ne.s32.totalorder %s151, %s153
      %p160 = scmp.eq.s32.totalorder %s31, 1
      %p161 = por %p159, %p160
      %p162 = scmp.ne.s32.totalorder %s153, %s154
      %p163 = scmp.eq.s32.totalorder %s31, 0
      %p164 = por %p162, %p163
      %p165 = scmp.ne.s32.totalorder %s153, %s154
      %p166 = scmp.eq.s32.totalorder %s32, 1
      %p167 = por %p165, %p166
      %p169 = scmp.ne.s32.totalorder %s154, %s168
      %p170 = scmp.eq.s32.totalorder %s32, 0
      %p171 = por %p169, %p170
      %s172 = sadd.s32 %s33, %s34
      %s173 = sadd.s32 %s45, %s41
      %s174 = ssub.s32 %s172, %s173
      %p175 = scmp.eq.s32.totalorder %s174, 0
      %s177 = sadd.s32 %s176, 1
      %s178 = scalar_select %p175, %s176, %s177
      %p181 = pneg %p175
      %p182 = scmp.eq.s32.totalorder %s26, 1
      %p183 = por %p181, %p182
      %p184 = scmp.ne.s32.totalorder %s176, %s179
      %p185 = scmp.eq.s32.totalorder %s26, 0
      %p186 = por %p184, %p185
      %p187 = scmp.ne.s32.totalorder %s176, %s179
      %p188 = scmp.eq.s32.totalorder %s31, 1
      %p189 = por %p187, %p188
      %p190 = scmp.ne.s32.totalorder %s179, %s180
      %p191 = scmp.eq.s32.totalorder %s31, 0
      %p192 = por %p190, %p191
      %p193 = scmp.ne.s32.totalorder %s179, %s180
      %p194 = scmp.eq.s32.totalorder %s32, 1
      %p195 = por %p193, %p194
      %p197 = scmp.ne.s32.totalorder %s180, %s196
      %p198 = scmp.eq.s32.totalorder %s32, 0
      %p199 = por %p197, %p198
      %s200 = sadd.s32 %s33, %s34
      %s201 = sadd.s32 %s45, %s41
      %s202 = ssub.s32 %s200, %s201
      %p203 = scmp.eq.s32.totalorder %s202, 0
      %s205 = sadd.s32 %s204, 1
      %s206 = scalar_select %p203, %s204, %s205
      %p209 = pneg %p203
      %p210 = scmp.eq.s32.totalorder %s26, 1
      %p211 = por %p209, %p210
      %p212 = scmp.ne.s32.totalorder %s204, %s207
      %p213 = scmp.eq.s32.totalorder %s26, 0
      %p214 = por %p212, %p213
      %p215 = scmp.ne.s32.totalorder %s204, %s207
      %p216 = scmp.eq.s32.totalorder %s31, 1
      %p217 = por %p215, %p216
      %p218 = scmp.ne.s32.totalorder %s207, %s208
      %p219 = scmp.eq.s32.totalorder %s31, 0
      %p220 = por %p218, %p219
      %p221 = scmp.ne.s32.totalorder %s207, %s208
      %p222 = scmp.eq.s32.totalorder %s32, 1
      %p223 = por %p221, %p222
      %p225 = scmp.ne.s32.totalorder %s208, %s224
      %p226 = scmp.eq.s32.totalorder %s32, 0
      %p227 = por %p225, %p226
      %p228 = scmp.lt.s32.totalorder %s34, 0
      %s229 = scalar_select %p228, %s34, 0
      %p230 = scmp.lt.s32.totalorder %s41, 0
      %s231 = scalar_select %p230, %s41, 0
      %s232 = ssub.s32 %s229, %s231
      %p233 = scmp.eq.s32.totalorder %s232, 0
      %s235 = sadd.s32 %s234, 1
      %s236 = scalar_select %p233, %s234, %s235
      %p239 = pneg %p233
      %p240 = scmp.eq.s32.totalorder %s26, 1
      %p241 = por %p239, %p240
      %p242 = scmp.ne.s32.totalorder %s234, %s237
      %p243 = scmp.eq.s32.totalorder %s26, 0
      %p244 = por %p242, %p243
      %p245 = scmp.ne.s32.totalorder %s234, %s237
      %p246 = scmp.eq.s32.totalorder %s31, 1
      %p247 = por %p245, %p246
      %p248 = scmp.ne.s32.totalorder %s237, %s238
      %p249 = scmp.eq.s32.totalorder %s31, 0
      %p250 = por %p248, %p249
      %p251 = scmp.ne.s32.totalorder %s237, %s238
      %p252 = scmp.eq.s32.totalorder %s32, 1
      %p253 = por %p251, %p252
      %p255 = scmp.ne.s32.totalorder %s238, %s254
      %p256 = scmp.eq.s32.totalorder %s32, 0
      %p257 = por %p255, %p256
      %p258 = scmp.lt.s32.totalorder %s34, 0
      %s259 = scalar_select %p258, %s34, 0
      %p260 = scmp.lt.s32.totalorder %s41, 0
      %s261 = scalar_select %p260, %s41, 0
      %s262 = ssub.s32 %s259, %s261
      %p263 = scmp.eq.s32.totalorder %s262, 0
      %s265 = sadd.s32 %s264, 1
      %s266 = scalar_select %p263, %s264, %s265
      %p269 = pneg %p263
      %p270 = scmp.eq.s32.totalorder %s26, 1
      %p271 = por %p269, %p270
      %p272 = scmp.ne.s32.totalorder %s264, %s267
      %p273 = scmp.eq.s32.totalorder %s26, 0
      %p274 = por %p272, %p273
      %p275 = scmp.ne.s32.totalorder %s264, %s267
      %p276 = scmp.eq.s32.totalorder %s31, 1
      %p277 = por %p275, %p276
      %p278 = scmp.ne.s32.totalorder %s267, %s268
      %p279 = scmp.eq.s32.totalorder %s31, 0
      %p280 = por %p278, %p279
      %p281 = scmp.ne.s32.totalorder %s267, %s268
      %p282 = scmp.eq.s32.totalorder %s32, 1
      %p283 = por %p281, %p282
      %p285 = scmp.ne.s32.totalorder %s268, %s284
      %p286 = scmp.eq.s32.totalorder %s32, 0
      %p287 = por %p285, %p286
      %s288 = ssub.s32 %s33, %s45
      %p289 = scmp.eq.s32.totalorder %s288, 0
      %s291 = sadd.s32 %s290, 1
      %s292 = scalar_select %p289, %s290, %s291
      %p295 = pneg %p289
      %p296 = scmp.eq.s32.totalorder %s26, 1
      %p297 = por %p295, %p296
      %p298 = scmp.ne.s32.totalorder %s290, %s293
      %p299 = scmp.eq.s32.totalorder %s26, 0
      %p300 = por %p298, %p299
      %p301 = scmp.ne.s32.totalorder %s290, %s293
      %p302 = scmp.eq.s32.totalorder %s31, 1
      %p303 = por %p301, %p302
      %p304 = scmp.ne.s32.totalorder %s293, %s294
      %p305 = scmp.eq.s32.totalorder %s31, 0
      %p306 = por %p304, %p305
      %p307 = scmp.ne.s32.totalorder %s293, %s294
      %p308 = scmp.eq.s32.totalorder %s32, 1
      %p309 = por %p307, %p308
      %p311 = scmp.ne.s32.totalorder %s294, %s310
      %p312 = scmp.eq.s32.totalorder %s32, 0
      %p313 = por %p311, %p312
      %p314 = scmp.le.s32.totalorder 1, %s26
      %p315 = scmp.lt.s32.totalorder %s26, 3
      %p316 = pnand %p314, %p315
      %p317 = pneg %p316
      // Predicated region
      $region9: #{tpu_custom_call.1} parent=5 // pred_check
        _
      $region10: #{tpu_custom_call.1} parent=5 // pred_check_branch
        %319 = sbr.rel (%p316) target = $region12
      $region11: #{tpu_custom_call.1} parent=5 // pred_region
        %s320 = ssub.s32 %s26, 1
        // Predicated region
        $region13: #{tpu_custom_call.1} parent=11 // pred_check
          %p321 = pneg %p59
        $region14: #{tpu_custom_call.1} parent=11 // pred_check_branch
          %323 = sbr.rel (%p321) target = $region16
        $region15: #{tpu_custom_call.1} parent=11 // pred_region
          %s325 = ssub.s32 256, 256
          %326 = vsyncadd [#allocation5], %s325
          %s327 = sshll.u32 [#allocation4], 4
          %s328 = int_to_ptr.vmem [resolvable:$true] %s327
          %333 = dma.hbm_to_vmem [thread:$0]  %s0, 256, %s328, [#allocation5], 128, 128, 8
        $region16: #{tpu_custom_call.1} parent=11 // pred_fallthru
          _
        // Predicated region
        $region17: #{tpu_custom_call.1} parent=11 // pred_check
          %p334 = pneg %p80
        $region18: #{tpu_custom_call.1} parent=11 // pred_check_branch
          %336 = sbr.rel (%p334) target = $region20
        $region19: #{tpu_custom_call.1} parent=11 // pred_region
          %s338 = ssub.s32 256, 256
          %339 = vsyncadd [#allocation8], %s338
          %s340 = sshll.u32 [#allocation7], 4
          %s341 = int_to_ptr.vmem [resolvable:$true] %s340
          %346 = dma.hbm_to_vmem [thread:$0]  %s1, 256, %s341, [#allocation8], 128, 128, 8
        $region20: #{tpu_custom_call.1} parent=11 // pred_fallthru
          _
        // Predicated region
        $region21: #{tpu_custom_call.1} parent=11 // pred_check
          %p347 = pneg %p101
        $region22: #{tpu_custom_call.1} parent=11 // pred_check_branch
          %349 = sbr.rel (%p347) target = $region24
        $region23: #{tpu_custom_call.1} parent=11 // pred_region
          %s351 = ssub.s32 256, 256
          %352 = vsyncadd [#allocation8], %s351
          %s353 = sshll.u32 [#allocation9], 4
          %s354 = int_to_ptr.vmem [resolvable:$true] %s353
          %359 = dma.hbm_to_vmem [thread:$0]  %s2, 256, %s354, [#allocation8], 128, 128, 8
        $region24: #{tpu_custom_call.1} parent=11 // pred_fallthru
          _
        // Predicated region
        $region25: #{tpu_custom_call.1} parent=11 // pred_check
          %p360 = pneg %p122
        $region26: #{tpu_custom_call.1} parent=11 // pred_check_branch
          %362 = sbr.rel (%p360) target = $region28
        $region27: #{tpu_custom_call.1} parent=11 // pred_region
          %s364 = ssub.s32 256, 256
          %365 = vsyncadd [#allocation11], %s364
          %s366 = sshll.u32 [#allocation10], 4
          %s367 = int_to_ptr.vmem [resolvable:$true] %s366
          %372 = dma.hbm_to_vmem [thread:$0]  %s3, 256, %s367, [#allocation11], 128, 128, 8
        $region28: #{tpu_custom_call.1} parent=11 // pred_fallthru
          _
        // Predicated region
        $region29: #{tpu_custom_call.1} parent=11 // pred_check
          %p373 = pneg %p143
        $region30: #{tpu_custom_call.1} parent=11 // pred_check_branch
          %375 = sbr.rel (%p373) target = $region32
        $region31: #{tpu_custom_call.1} parent=11 // pred_region
          %s377 = ssub.s32 256, 256
          %378 = vsyncadd [#allocation11], %s377
          %s379 = sshll.u32 [#allocation12], 4
          %s380 = int_to_ptr.vmem [resolvable:$true] %s379
          %385 = dma.hbm_to_vmem [thread:$0]  %s4, 256, %s380, [#allocation11], 128, 128, 8
        $region32: #{tpu_custom_call.1} parent=11 // pred_fallthru
          _
        // Predicated region
        $region33: #{tpu_custom_call.1} parent=11 // pred_check
          %p386 = pneg %p164
        $region34: #{tpu_custom_call.1} parent=11 // pred_check_branch
          %388 = sbr.rel (%p386) target = $region36
        $region35: #{tpu_custom_call.1} parent=11 // pred_region
          _
        $region36: #{tpu_custom_call.1} parent=11 // pred_fallthru
          _
        // Predicated region
        $region37: #{tpu_custom_call.1} parent=11 // pred_check
          %p389 = pneg %p250
        $region38: #{tpu_custom_call.1} parent=11 // pred_check_branch
          %391 = sbr.rel (%p389) target = $region40
        $region39: #{tpu_custom_call.1} parent=11 // pred_region
          %p392 = scmp.lt.s32.totalorder %s36, 0
          %s393 = scalar_select %p392, %s36, 0
          %s394 = smul.u32 2, %s393
          %s396 = ssub.s32 256, 256
          %397 = vsyncadd [#allocation17], %s396
          %s398 = smul.addr %s394, 128
          %s399 = scalar_lea.hbm %s8, %s398
          %s400 = sshll.u32 [#allocation16], 4
          %s401 = int_to_ptr.vmem [resolvable:$true] %s400
          %406 = dma.hbm_to_vmem [thread:$0]  %s399, 256, %s401, [#allocation17], 128, 128, 8
        $region40: #{tpu_custom_call.1} parent=11 // pred_fallthru
          _
        // Predicated region
        $region41: #{tpu_custom_call.1} parent=11 // pred_check
          %p407 = pneg %p280
        $region42: #{tpu_custom_call.1} parent=11 // pred_check_branch
          %409 = sbr.rel (%p407) target = $region44
        $region43: #{tpu_custom_call.1} parent=11 // pred_region
          %p410 = scmp.lt.s32.totalorder %s36, 0
          %s411 = scalar_select %p410, %s36, 0
          %s412 = smul.u32 2, %s411
          %p413 = scmp.lt.s32.totalorder %s412, 1
          %s414 = scalar_select %p413, %s412, 1
          %s415 = smul.addr %s414, 8
          %s416 = scalar_lea.vmem %s9, %s415
          %p417 = scmp.lt.s32.totalorder %s36, 0
          %s418 = scalar_select %p417, %s36, 0
          %s419 = smul.u32 2, %s418
        $region44: #{tpu_custom_call.1} parent=11 // pred_fallthru
          _
      $region12: #{tpu_custom_call.1} parent=5 // pred_fallthru
        _
      %p420 = scmp.lt.s32.totalorder %s26, 2
      // Predicated region
      $region45: #{tpu_custom_call.1} parent=5 // pred_check
        %p421 = pneg %p420
      $region46: #{tpu_custom_call.1} parent=5 // pred_check_branch
        %423 = sbr.rel (%p421) target = $region48
      $region47: #{tpu_custom_call.1} parent=5 // pred_region
        // Predicated region
        $region49: #{tpu_custom_call.1} parent=47 // pred_check
          %p424 = pneg %p186
        $region50: #{tpu_custom_call.1} parent=47 // pred_check_branch
          %426 = sbr.rel (%p424) target = $region52
        $region51: #{tpu_custom_call.1} parent=47 // pred_region
          %s427 = sand.u32 %s26, 1
          %s428 = scalar_lea.sflag [#allocation14], %s427
          %s429 = sand.u32 %s176, 1
          %s430 = smul.addr %s429, 64
          %s431 = scalar_lea.vmem [#allocation13], %s430
          %s432 = sadd.s32 %s33, %s34
          %s433 = smul.u32 8, %s432
          %s435 = ssub.s32 1024, 1024
          %436 = vsyncadd %s428, %s435
          %s437 = smul.addr %s433, 128
          %s438 = scalar_lea.hbm %s6, %s437
          %s439 = sshll.u32 %s431, 4
          %s440 = int_to_ptr.vmem [resolvable:$true] %s439
          %445 = dma.hbm_to_vmem [thread:$0]  %s438, 1024, %s440, %s428, 128, 128, 8
        $region52: #{tpu_custom_call.1} parent=47 // pred_fallthru
          _
        // Predicated region
        $region53: #{tpu_custom_call.1} parent=47 // pred_check
          %p446 = pneg %p214
        $region54: #{tpu_custom_call.1} parent=47 // pred_check_branch
          %448 = sbr.rel (%p446) target = $region56
        $region55: #{tpu_custom_call.1} parent=47 // pred_region
          %s449 = sand.u32 %s26, 1
          %s450 = scalar_lea.sflag [#allocation14], %s449
          %s451 = sand.u32 %s204, 1
          %s452 = smul.addr %s451, 64
          %s453 = scalar_lea.vmem [#allocation15], %s452
          %s454 = sadd.s32 %s33, %s34
          %s455 = smul.u32 8, %s454
          %s457 = ssub.s32 1024, 1024
          %458 = vsyncadd %s450, %s457
          %s459 = smul.addr %s455, 128
          %s460 = scalar_lea.hbm %s7, %s459
          %s461 = sshll.u32 %s453, 4
          %s462 = int_to_ptr.vmem [resolvable:$true] %s461
          %467 = dma.hbm_to_vmem [thread:$0]  %s460, 1024, %s462, %s450, 128, 128, 8
        $region56: #{tpu_custom_call.1} parent=47 // pred_fallthru
          _
      $region48: #{tpu_custom_call.1} parent=5 // pred_fallthru
        _
      %p468 = scmp.le.s32.totalorder 1, %s26
      %p469 = scmp.lt.s32.totalorder %s26, 3
      %p470 = pnand %p468, %p469
      %p471 = pneg %p470
      // Predicated region
      $region57: #{tpu_custom_call.1} parent=5 // pred_check
        _
      $region58: #{tpu_custom_call.1} parent=5 // pred_check_branch
        %473 = sbr.rel (%p470) target = $region60
      $region59: #{tpu_custom_call.1} parent=5 // pred_region
        %s474 = ssub.s32 %s26, 1
        // Predicated region
        $region61: #{tpu_custom_call.1} parent=59 // pred_check
          %p475 = pneg %p59
        $region62: #{tpu_custom_call.1} parent=59 // pred_check_branch
          %477 = sbr.rel (%p475) target = $region64
        $region63: #{tpu_custom_call.1} parent=59 // pred_region
          %478 = dma.done [#allocation5], 256
        $region64: #{tpu_custom_call.1} parent=59 // pred_fallthru
          _
        // Predicated region
        $region65: #{tpu_custom_call.1} parent=59 // pred_check
          %p479 = pneg %p80
        $region66: #{tpu_custom_call.1} parent=59 // pred_check_branch
          %481 = sbr.rel (%p479) target = $region68
        $region67: #{tpu_custom_call.1} parent=59 // pred_region
          %482 = dma.done [#allocation8], 256
        $region68: #{tpu_custom_call.1} parent=59 // pred_fallthru
          _
        // Predicated region
        $region69: #{tpu_custom_call.1} parent=59 // pred_check
          %p483 = pneg %p101
        $region70: #{tpu_custom_call.1} parent=59 // pred_check_branch
          %485 = sbr.rel (%p483) target = $region72
        $region71: #{tpu_custom_call.1} parent=59 // pred_region
          %486 = dma.done [#allocation8], 256
        $region72: #{tpu_custom_call.1} parent=59 // pred_fallthru
          _
        // Predicated region
        $region73: #{tpu_custom_call.1} parent=59 // pred_check
          %p487 = pneg %p122
        $region74: #{tpu_custom_call.1} parent=59 // pred_check_branch
          %489 = sbr.rel (%p487) target = $region76
        $region75: #{tpu_custom_call.1} parent=59 // pred_region
          %490 = dma.done [#allocation11], 256
        $region76: #{tpu_custom_call.1} parent=59 // pred_fallthru
          _
        // Predicated region
        $region77: #{tpu_custom_call.1} parent=59 // pred_check
          %p491 = pneg %p143
        $region78: #{tpu_custom_call.1} parent=59 // pred_check_branch
          %493 = sbr.rel (%p491) target = $region80
        $region79: #{tpu_custom_call.1} parent=59 // pred_region
          %494 = dma.done [#allocation11], 256
        $region80: #{tpu_custom_call.1} parent=59 // pred_fallthru
          _
        %s495 = sand.u32 %s31, 1
        %s496 = scalar_lea.sflag [#allocation14], %s495
        %s497 = sand.u32 %s179, 1
        %s498 = smul.addr %s497, 64
        %s499 = scalar_lea.vmem [#allocation13], %s498
        // Predicated region
        $region81: #{tpu_custom_call.1} parent=59 // pred_check
          %p500 = pneg %p192
        $region82: #{tpu_custom_call.1} parent=59 // pred_check_branch
          %502 = sbr.rel (%p500) target = $region84
        $region83: #{tpu_custom_call.1} parent=59 // pred_region
          %503 = dma.done %s496, 1024
        $region84: #{tpu_custom_call.1} parent=59 // pred_fallthru
          _
        %s504 = sand.u32 %s31, 1
        %s505 = scalar_lea.sflag [#allocation14], %s504
        %s506 = sand.u32 %s207, 1
        %s507 = smul.addr %s506, 64
        %s508 = scalar_lea.vmem [#allocation15], %s507
        // Predicated region
        $region85: #{tpu_custom_call.1} parent=59 // pred_check
          %p509 = pneg %p220
        $region86: #{tpu_custom_call.1} parent=59 // pred_check_branch
          %511 = sbr.rel (%p509) target = $region88
        $region87: #{tpu_custom_call.1} parent=59 // pred_region
          %512 = dma.done %s505, 1024
        $region88: #{tpu_custom_call.1} parent=59 // pred_fallthru
          _
        // Predicated region
        $region89: #{tpu_custom_call.1} parent=59 // pred_check
          %p513 = pneg %p250
        $region90: #{tpu_custom_call.1} parent=59 // pred_check_branch
          %515 = sbr.rel (%p513) target = $region92
        $region91: #{tpu_custom_call.1} parent=59 // pred_region
          %516 = dma.done [#allocation17], 256
        $region92: #{tpu_custom_call.1} parent=59 // pred_fallthru
          _
        %p517 = pneg %p59
        %p518 = pneg %p56
        %p519 = pneg %p80
        %p520 = pneg %p77
        %p521 = pneg %p101
        %p522 = pneg %p98
        %p523 = pneg %p122
        %p524 = pneg %p119
        %p525 = pneg %p143
        %p526 = pneg %p140
        %p527 = pneg %p164
        %p528 = pneg %p161
        %s529 = sand.u32 %s31, 1
        %s530 = scalar_lea.sflag [#allocation14], %s529
        %s531 = sand.u32 %s179, 1
        %s532 = smul.addr %s531, 64
        %s533 = scalar_lea.vmem [#allocation13], %s532
        %p534 = pneg %p192
        %p535 = pneg %p189
        %s536 = sand.u32 %s31, 1
        %s537 = scalar_lea.sflag [#allocation14], %s536
        %s538 = sand.u32 %s207, 1
        %s539 = smul.addr %s538, 64
        %s540 = scalar_lea.vmem [#allocation15], %s539
        %p541 = pneg %p220
        %p542 = pneg %p217
        %p543 = pneg %p250
        %p544 = pneg %p247
        %p545 = scmp.lt.s32.totalorder %s36, 0
        %s546 = scalar_select %p545, %s36, 0
        %s547 = smul.u32 2, %s546
        %p548 = scmp.lt.s32.totalorder %s547, 1
        %s549 = scalar_select %p548, %s547, 1
        %s550 = smul.addr %s549, 8
        %s551 = scalar_lea.vmem %s9, %s550
        %p552 = pneg %p280
        %p553 = pneg %p277
        %p554 = pneg %p306
        %p555 = pneg %p303
        %s556 = sand.u32 %s293, 1
        %s557 = scalar_lea.sflag [#allocation6], %s556
        %s558 = sand.u32 %s293, 1
        %s559 = smul.addr %s558, 8
        %s560 = scalar_lea.vmem [#allocation18], %s559
        %s561 = sadd.s32 %s35, %s36
        %s562 = smul.u32 8, %s561
        %s563 = sadd.s32 %s35, %s36
        %s564 = smul.u32 8, %s563
        %p565 = scmp.lt.s32.totalorder %s36, 0
        %s566 = scalar_select %p565, %s36, 0
        %s567 = smul.u32 2, %s566
        %p568 = scmp.lt.s32.totalorder %s36, 0
        %s569 = scalar_select %p568, %s36, 0
        %s570 = smul.u32 2, %s569
        %p571 = scmp.lt.s32.totalorder %s570, 1
        %s572 = scalar_select %p571, %s570, 1
        %s573 = smul.addr %s572, 8
        %s574 = scalar_lea.vmem %s9, %s573
        %p575 = scmp.lt.s32.totalorder %s36, 0
        %s576 = scalar_select %p575, %s36, 0
        %s577 = smul.u32 2, %s576
        %p578 = scmp.eq.s32.totalorder %s36, 0
        // Predicated region
        $region93: #{tpu_custom_call.1} parent=59 // pred_check
          %p579 = pneg %p578
        $region94: #{tpu_custom_call.1} parent=59 // pred_check_branch
          %581 = sbr.rel (%p579) target = $region96
        $region95: #{tpu_custom_call.1} parent=59 // pred_region
          %582 = vst [vmem:[#allocation2] sm:$0xff] 0.0
          %583 = vst [vmem:[#allocation3] sm:$0xff] 0.0
        $region96: #{tpu_custom_call.1} parent=59 // pred_fallthru
          _
        %v584 = vld [vmem:[%s499] sm:$0xff]
        %v585 = vld [vmem:[%s499 + $0x8] sm:$0xff]
        %v586 = vld [vmem:[%s499 + $0x10] sm:$0xff]
        %v587 = vld [vmem:[%s499 + $0x18] sm:$0xff]
        %v588 = vld [vmem:[%s499 + $0x20] sm:$0xff]
        %v589 = vld [vmem:[%s499 + $0x28] sm:$0xff]
        %v590 = vld [vmem:[%s499 + $0x30] sm:$0xff]
        %v591 = vld [vmem:[%s499 + $0x38] sm:$0xff]
        %v592 = vld [vmem:[%s508] sm:$0xff]
        %v593 = vld [vmem:[%s508 + $0x8] sm:$0xff]
        %v594 = vld [vmem:[%s508 + $0x10] sm:$0xff]
        %v595 = vld [vmem:[%s508 + $0x18] sm:$0xff]
        %v596 = vld [vmem:[%s508 + $0x20] sm:$0xff]
        %v597 = vld [vmem:[%s508 + $0x28] sm:$0xff]
        %v598 = vld [vmem:[%s508 + $0x30] sm:$0xff]
        %v599 = vld [vmem:[%s508 + $0x38] sm:$0xff]
        %v600 = vmul.f32 %v584, %v584
        %v601 = vmul.f32 %v585, %v585
        %v602 = vmul.f32 %v586, %v586
        %v603 = vmul.f32 %v587, %v587
        %v604 = vmul.f32 %v588, %v588
        %v605 = vmul.f32 %v589, %v589
        %v606 = vmul.f32 %v590, %v590
        %v607 = vmul.f32 %v591, %v591
        %v608 = vmul.f32 %v592, %v592
        %v609 = vmul.f32 %v593, %v593
        %v610 = vmul.f32 %v594, %v594
        %v611 = vmul.f32 %v595, %v595
        %v612 = vmul.f32 %v596, %v596
        %v613 = vmul.f32 %v597, %v597
        %v614 = vmul.f32 %v598, %v598
        %v615 = vmul.f32 %v599, %v599
        %v616 = vadd.f32 %v600, %v608
        %v617 = vadd.f32 %v601, %v609
        %v618 = vadd.f32 %v602, %v610
        %v619 = vadd.f32 %v603, %v611
        %v620 = vadd.f32 %v604, %v612
        %v621 = vadd.f32 %v605, %v613
        %v622 = vadd.f32 %v606, %v614
        %v623 = vadd.f32 %v607, %v615
        %v624 = vld [vmem:[#allocation2] sm:$0xff]
        %v625 = vadd.f32 %v616, %v617
        %v626 = vadd.f32 %v625, %v618
        %v627 = vadd.f32 %v626, %v619
        %v628 = vadd.f32 %v627, %v620
        %v629 = vadd.f32 %v628, %v621
        %v630 = vadd.f32 %v629, %v622
        %v631 = vadd.f32 %v630, %v623
        %v632 = vadd.f32 %v624, %v631
        %633 = vst [vmem:[#allocation2] sm:$0xff] %v632
        %p634 = scmp.eq.s32.totalorder %s35, 0
        %p635 = scmp.lt.s32.totalorder %s36, 1
        %p636 = pnand %p634, %p635
        %p637 = pneg %p636
        // Predicated region
        $region97: #{tpu_custom_call.1} parent=59 // pred_check
          _
        $region98: #{tpu_custom_call.1} parent=59 // pred_check_branch
          %639 = sbr.rel (%p636) target = $region100
        $region99: #{tpu_custom_call.1} parent=59 // pred_region
          %v640 = vld [vmem:[#allocation16] sm:$0xff]
          %v641 = vld [vmem:[#allocation16 + $0x8] sm:$0xff]
          %v642 = vld [vmem:[%s574] sm:$0xff]
          %v643 = vld [vmem:[%s574 + $0x8] sm:$0xff]
          %v644 = vmul.f32 %v640, %v640
          %v645 = vmul.f32 %v641, %v641
          %v646 = vmul.f32 %v642, %v642
          %v647 = vmul.f32 %v643, %v643
          %v648 = vadd.f32 %v644, %v646
          %v649 = vadd.f32 %v645, %v647
          %v650 = vld [vmem:[#allocation3] sm:$0xff]
          %v651 = vadd.f32 %v648, %v649
          %v652 = vadd.f32 %v650, %v651
          %653 = vst [vmem:[#allocation3] sm:$0xff] %v652
        $region100: #{tpu_custom_call.1} parent=59 // pred_fallthru
          _
        // Predicated region
        $region101: #{tpu_custom_call.1} parent=59 // pred_check
          %p654 = pneg %p578
        $region102: #{tpu_custom_call.1} parent=59 // pred_check_branch
          %656 = sbr.rel (%p654) target = $region104
        $region103: #{tpu_custom_call.1} parent=59 // pred_region
          %v657 = vld [vmem:[#allocation2] sm:$0xff]
          %658 = vadd.xlane.f32.xlu0 %v657
          %v659 = vpop.xlane.xlu0 %658
          %v660 = vrot.slane %v659, 4
          %v661 = vadd.f32 %v659, %v660
          %v662 = vrot.slane %v661, 2
          %v663 = vadd.f32 %v661, %v662
          %v664 = vrot.slane %v663, 1
          %v665 = vadd.f32 %v663, %v664
          %s666 = vtos %v665
          %s667 = smul.f32 %s666, 0.005
          %v668 = vrcp.pop 64.0
          %s669 = vtos %v668
          %s670 = smul.f32 %s667, %s669
          %v671 = vstv %s670
          %v672 = vadd.f32 %v671, 0.0
          %673 = vst [vmem:[%s560] sm:$0xff] %v672
        $region104: #{tpu_custom_call.1} parent=59 // pred_fallthru
          _
        %p674 = pnand %p578, %p634
        %p675 = pneg %p674
        // Predicated region
        $region105: #{tpu_custom_call.1} parent=59 // pred_check
          _
        $region106: #{tpu_custom_call.1} parent=59 // pred_check_branch
          %677 = sbr.rel (%p674) target = $region108
        $region107: #{tpu_custom_call.1} parent=59 // pred_region
          %v678 = vld [vmem:[#allocation4] sm:$0xff]
          %v679 = vld [vmem:[#allocation4 + $0x8] sm:$0xff]
          %v680 = vld [vmem:[#allocation12] sm:$0xff]
          %v681 = vld [vmem:[#allocation12 + $0x8] sm:$0xff]
          %v682 = vmul.f32 %v678, %v680
          %v683 = vmul.f32 %v679, %v681
          %v684 = vld [vmem:[#allocation10] sm:$0xff]
          %v685 = vld [vmem:[#allocation10 + $0x8] sm:$0xff]
          %v686 = vmul.f32 %v682, %v684
          %v687 = vmul.f32 %v683, %v685
          %688 = vadd.xlane.f32.xlu0 %v686
          %v689 = vpop.xlane.xlu0 %688
          %690 = vadd.xlane.f32.xlu0 %v687
          %v691 = vpop.xlane.xlu0 %690
          %v692 = vld [vmem:[#allocation7] sm:$0xff]
          %v693 = vld [vmem:[#allocation7 + $0x8] sm:$0xff]
          %v694 = vld [vmem:[%s5] sm:$0xff]
          %v695 = vld [vmem:[%s5 + $0x8] sm:$0xff]
          %v696 = vmul.f32 %v692, %v694
          %v697 = vmul.f32 %v693, %v695
          %v698 = vld [vmem:[#allocation9] sm:$0xff]
          %v699 = vld [vmem:[#allocation9 + $0x8] sm:$0xff]
          %v700 = vmul.f32 %v696, %v698
          %v701 = vmul.f32 %v697, %v699
          %702 = vadd.xlane.f32.xlu0 %v700
          %v703 = vpop.xlane.xlu0 %702
          %704 = vadd.xlane.f32.xlu0 %v701
          %v705 = vpop.xlane.xlu0 %704
          %v706 = vadd.f32 %v689, %v703
          %v707 = vadd.f32 %v691, %v705
          %v708 = vmul.f32 %v706, 0.5
          %v709 = vmul.f32 %v707, 0.5
          %v710 = vmax.f32 %v708, -20.0
          %v711 = vmax.f32 %v709, -20.0
          %v712 = vmin.f32 %v710, 20.0
          %v713 = vmin.f32 %v711, 20.0
          %v714 = vsub.f32 %v713, %v712
          %v715 = vmax.f32 %v714, 0.0
          %v716 = vand.u32 2147483647, %v714
          %v717 = vsub.f32 0.0, %v716
          %v718 = vmul.f32 %v717, 1.442695
          %v719 = vpow.pop %v718
          %v720 = vadd.f32 %v719, 1.0
          %v721 = vlog2.pop %v720
          %v722 = vmul.f32 %v721, 0.6931472
          %v723 = vmul.f32 -0.5, %v719
          %v724 = vadd.f32 %v723, 1.0
          %v725 = vmul.f32 %v724, %v719
          %v726 = vand.u32 2147483647, %v719
          %vm727 = vcmp.lt.f32.partialorder %v726, 0.0004427343
          %v728 = vsel %vm727, %v725, %v722
          %v729 = vadd.f32 %v715, %v728
          %v730 = vlaneseq
          %v731 = vand.u32 %v730, 127
          %vm732 = vcmp.lt.s32.totalorder %v731, 8
          %v734 = vlaneseq
          %v735 = vshrl.u32 %v734, 7
          %v736 = vsub.s32 %v731, %v735
          %v737 = vrot.slane %v729, %v736
          %v739 = vsel %vm732, %v737, 0.0
          %vm740 = vcmask 57344
          %v741 = vsel %vm740, %v739, 0.0
          %742 = vadd.xlane.f32.xlu0 %v741
          %v743 = vpop.xlane.xlu0 %742
          %v744 = vrot.slane %v743, 4
          %v745 = vadd.f32 %v743, %v744
          %v746 = vrot.slane %v745, 2
          %v747 = vadd.f32 %v745, %v746
          %v748 = vrot.slane %v747, 1
          %v749 = vadd.f32 %v747, %v748
          %s750 = vtos %v749
          %v751 = vld [vmem:[#allocation3] sm:$0xff]
          %752 = vadd.xlane.f32.xlu0 %v751
          %v753 = vpop.xlane.xlu0 %752
          %v754 = vrot.slane %v753, 4
          %v755 = vadd.f32 %v753, %v754
          %v756 = vrot.slane %v755, 2
          %v757 = vadd.f32 %v755, %v756
          %v758 = vrot.slane %v757, 1
          %v759 = vadd.f32 %v757, %v758
          %s760 = vtos %v759
          %v761 = vld [vmem:[%s560] sm:$0xff]
          %s762 = smul.f32 %s760, 0.005
          %v763 = vrcp.pop 16.0
          %s764 = vtos %v763
          %s765 = smul.f32 %s762, %s764
          %s766 = sadd.f32 %s750, %s765
          %v767 = vstv %s766
          %v768 = vadd.f32 %v761, %v767
          %769 = vst [vmem:[%s560] sm:$0xff] %v768
        $region108: #{tpu_custom_call.1} parent=59 // pred_fallthru
          _
        %s770 = sand.u32 %s293, 1
        %s771 = scalar_lea.sflag [#allocation6], %s770
        %s772 = sand.u32 %s293, 1
        %s773 = smul.addr %s772, 8
        %s774 = scalar_lea.vmem [#allocation18], %s773
        // Predicated region
        $region109: #{tpu_custom_call.1} parent=59 // pred_check
          %p775 = pneg %p303
        $region110: #{tpu_custom_call.1} parent=59 // pred_check_branch
          %777 = sbr.rel (%p775) target = $region112
        $region111: #{tpu_custom_call.1} parent=59 // pred_region
          %s779 = ssub.s32 128, 128
          %780 = vsyncadd %s771, %s779
          %s781 = smul.addr %s35, 128
          %s782 = scalar_lea.hbm %s10, %s781
          %s784 = sshll.u32 %s774, 4
          %s785 = int_to_ptr.vmem [resolvable:$true] %s784
          %787 = dma.vmem_to_hbm [thread:$0]  %s785, 128, %s782, %s771
        $region112: #{tpu_custom_call.1} parent=59 // pred_fallthru
          _
      $region60: #{tpu_custom_call.1} parent=5 // pred_fallthru
        _
      %p788 = scmp.le.s32.totalorder 2, %s26
      // Predicated region
      $region113: #{tpu_custom_call.1} parent=5 // pred_check
        %p789 = pneg %p788
      $region114: #{tpu_custom_call.1} parent=5 // pred_check_branch
        %791 = sbr.rel (%p789) target = $region116
      $region115: #{tpu_custom_call.1} parent=5 // pred_region
        %s792 = ssub.s32 %s26, 2
        // Predicated region
        $region117: #{tpu_custom_call.1} parent=115 // pred_check
          %p793 = pneg %p309
        $region118: #{tpu_custom_call.1} parent=115 // pred_check_branch
          %795 = sbr.rel (%p793) target = $region120
        $region119: #{tpu_custom_call.1} parent=115 // pred_region
          %s796 = sand.u32 %s294, 1
          %s797 = scalar_lea.sflag [#allocation6], %s796
          %s798 = sand.u32 %s294, 1
          %s799 = smul.addr %s798, 8
          %s800 = scalar_lea.vmem [#allocation18], %s799
          %801 = dma.done %s797, 128
        $region120: #{tpu_custom_call.1} parent=115 // pred_fallthru
          _
      $region116: #{tpu_custom_call.1} parent=5 // pred_fallthru
        _
    $region6: #{tpu_custom_call.1} parent=1 // loop_footer
      %s30 = sadd.s32 1, %s26
    $region7: #{tpu_custom_call.1} parent=1 // loop_footer_branch
      %25 = sbr.rel target = $region3
    $region8: #{tpu_custom_call.1} parent=1 // loop_exit
      _
    %802 = vsyncpa [#allocation5], 1
    %s803 = scalar_lea.sflag [#allocation5], 1
    %804 = vsyncpa %s803, 1
    %805 = vsyncpa [#allocation8], 1
    %806 = vsyncpa [#allocation11], 1
    %807 = vsyncpa [#allocation14], 1
    %s808 = scalar_lea.sflag [#allocation14], 1
    %809 = vsyncpa %s808, 1
    %810 = vsyncpa [#allocation17], 1
    %811 = vsyncpa [#allocation6], 1
    %s812 = scalar_lea.sflag [#allocation6], 1
    %813 = vsyncpa %s812, 1

</llo_original>
